<compile_context>
chip_gen: v6e
topology: v6e:2x2x1
jax: 0.10.0
libtpu: 0.0.40
codegen_flags: <defaults>
</compile_context>

<pallas_src>
import math
from functools import partial

import jax
import jax.numpy as jnp
from jax.experimental import pallas as pl
from jax.experimental.pallas import tpu as pltpu


# ----------------------------- Pallas kernel --------------------------------
def _patch_embed_kernel(cols_ref, w_ref, p_ref, out_ref, *, e_real, inv_e, eps):
    """One fused matmul + conv-bias + LayerNorm per (batch, row-tile) grid step.

    cols_ref: (tile_n, Kpad)   im2col rows, K zero-padded to a lane multiple
    w_ref:    (Kpad, Epad)     conv weight slab, K/E zero-padded (resident)
    p_ref:    (3, Epad)        packed conv bias / LN gamma / LN beta, f32 (resident)
    out_ref:  (tile_n, Epad)   lane-dense output tile
    """
    # Single lane-dense MXU contraction; f32 accumulation.
    y = jnp.dot(cols_ref[...], w_ref[...], preferred_element_type=jnp.float32)
    y = y + p_ref[0:1, :]                              # conv bias (pad columns stay 0)

    epad = y.shape[-1]
    # Fused LayerNorm over the TRUE embed_dim, two-pass (centered) variance.
    mean = jnp.sum(y, axis=-1, keepdims=True) * inv_e  # pad columns of y are exactly 0
    d = y - mean
    if epad != e_real:                                 # static: mask lane padding so it
        lane = jax.lax.broadcasted_iota(jnp.int32, d.shape, 1)
        d = jnp.where(lane < e_real, d, 0.0)           # does not perturb the variance
    var = jnp.sum(d * d, axis=-1, keepdims=True) * inv_e
    y_norm = d * jax.lax.rsqrt(var + eps)
    out_ref[...] = (y_norm * p_ref[1:2, :] + p_ref[2:3, :]).astype(out_ref.dtype)


# ------------------------------- wrapper -------------------------------------
def _pick_tile_n(n, per_row_bytes, target_rows=4096, vmem_budget=40 << 20):
    """Largest divisor of `n` that is <= target_rows, sublane-aligned (or == n),
    and keeps the per-step double-buffered working set within `vmem_budget`."""
    best = None
    for t in range(1, n + 1):
        if n % t:
            continue
        if t != n and t % 8:
            continue
        if t > target_rows:
            continue
        if t * per_row_bytes > vmem_budget:
            continue
        if best is None or t > best:
            best = t
    return best if best is not None else n


def overlap_patch_embed(x, conv_w, conv_b, ln_w, ln_b, *,
                        patch_size=7, stride=4, eps=1e-5,
                        tile_n=None, compute_dtype=jnp.bfloat16,
                        out_dtype=None, return_padded=False):
    """x: (B,C,H,W); conv_w: (E,C,kh,kw); conv_b/ln_w/ln_b: (E,).
    Returns (out, H_out, W_out) with out of shape (B, H_out*W_out, E)
    (or (B, N, Epad) with zero lane padding if return_padded=True)."""
    B, C, H, W = x.shape
    E = conv_w.shape[0]
    kh = kw = patch_size
    pad = patch_size // 2
    out_dtype = x.dtype if out_dtype is None else out_dtype

    Ho = (H + 2 * pad - kh) // stride + 1
    Wo = (W + 2 * pad - kw) // stride + 1
    N = Ho * Wo
    K = kh * kw * C
    Kpad = -(-K // 128) * 128                    # lane-dense contraction dim
    Epad = -(-E // 128) * 128                    # lane-dense embed dim

    # --------- layout glue (XLA): full im2col, fused K = kh*kw*C -------------
    # For small C the fused contraction is worth the kh*kw/stride^2 im2col bytes;
    # the kernel then does a single big-K matmul per tile instead of kh tiny-K dots.
    # TODO(synk): for stages with kw*C >= 128, a per-kernel-row decomposition
    #             (K = kw*C per dot) would avoid the full im2col inflation.
    xc = x.astype(compute_dtype)
    xpad = jnp.pad(xc, ((0, 0), (0, 0), (pad, pad), (pad, pad)))
    patches = [xpad[:, :, i:i + stride * (Ho - 1) + 1:stride,
                          j:j + stride * (Wo - 1) + 1:stride]
               for i in range(kh) for j in range(kw)]          # kh*kw x (B,C,Ho,Wo)
    cols = jnp.stack(patches, axis=-1)                          # (B, C, Ho, Wo, P)
    cols = cols.transpose(0, 2, 3, 4, 1).reshape(B, N, K)       # last dim order (i,j,c)
    if Kpad != K:
        cols = jnp.pad(cols, ((0, 0), (0, 0), (0, Kpad - K)))

    # weight: (Kpad, Epad), matching the (i, j, c) column order; zero padded.
    w_r = conv_w.transpose(2, 3, 1, 0).reshape(K, E)
    w_r = jnp.pad(w_r, ((0, Kpad - K), (0, Epad - E))).astype(compute_dtype)
    # packed params: rows = conv bias, LN gamma, LN beta (f32, lane padded).
    params = jnp.stack([conv_b, ln_w, ln_b], axis=0).astype(jnp.float32)
    params = jnp.pad(params, ((0, 0), (0, Epad - E)))

    # --------- tile selection + explicit VMEM budget -------------------------
    in_bytes = jnp.dtype(compute_dtype).itemsize
    out_bytes = jnp.dtype(out_dtype).itemsize
    per_row = (2 * Kpad * in_bytes              # double-buffered cols tile
               + 2 * Epad * out_bytes           # double-buffered out tile
               + 3 * Epad * 4)                  # f32 matmul result / LN temporaries
    if tile_n is None:
        tile_n = _pick_tile_n(N, per_row)
    if N % tile_n != 0:
        raise ValueError("tile_n must divide the number of patches")
    if tile_n != N and tile_n % 8 != 0:
        raise ValueError("tile_n must be a multiple of 8 (sublanes) when tiling")
    n_tiles = N // tile_n

    resident = 2 * Kpad * Epad * in_bytes + 2 * 8 * Epad * 4    # weight + params
    vmem_limit = int(min(56 << 20,
                         max(32 << 20, tile_n * per_row + resident + (4 << 20))))

    kernel = partial(_patch_embed_kernel, e_real=E, inv_e=1.0 / E, eps=eps)
    out = pl.pallas_call(
        kernel,
        out_shape=jax.ShapeDtypeStruct((B, N, Epad), out_dtype),
        grid=(B, n_tiles),
        in_specs=[
            pl.BlockSpec((None, tile_n, Kpad), lambda b, n: (b, n, 0)),   # streamed
            pl.BlockSpec((Kpad, Epad), lambda b, n: (0, 0)),              # resident weight
            pl.BlockSpec((3, Epad), lambda b, n: (0, 0)),                 # resident params
        ],
        out_specs=pl.BlockSpec((None, tile_n, Epad), lambda b, n: (b, n, 0)),
        compiler_params=pltpu.CompilerParams(
            dimension_semantics=("parallel", "parallel"),
            vmem_limit_bytes=vmem_limit),
    )(cols, w_r, params)

    if not return_padded and Epad != E:
        # TODO(synk): consumers that accept a zero-padded embed dim should pass
        # return_padded=True and skip this extra HBM read+write pass.
        out = out[:, :, :E]
    return out, Ho, Wo


# ------------------------------ reference ------------------------------------
def _reference(x, conv_w, conv_b, ln_w, ln_b, *, stride, pad, eps=1e-5):
    y = jax.lax.conv_general_dilated(
        x, conv_w, window_strides=(stride, stride),
        padding=[(pad, pad), (pad, pad)],
        dimension_numbers=("NCHW", "OIHW", "NCHW"))
    y = y + conv_b[None, :, None, None]
    B, E, Ho, Wo = y.shape
    y = y.reshape(B, E, Ho * Wo).transpose(0, 2, 1)              # (B, N, E)
    mean = jnp.mean(y, axis=-1, keepdims=True)
    var = jnp.mean(jnp.square(y - mean), axis=-1, keepdims=True)
    y = (y - mean) * jax.lax.rsqrt(var + eps)
    return y * ln_w + ln_b, Ho, Wo


# --------------------------------- main ---------------------------------------
if __name__ == "__main__":
    B, C, H, W = 2, 4, 16, 16
    patch_size, stride, embed_dim = 7, 4, 32

    key = jax.random.PRNGKey(0)
    kx, kw_, kb, kg, kbt = jax.random.split(key, 5)

    x = jax.random.normal(kx, (B, C, H, W), dtype=jnp.float32)
    fan_out = patch_size * patch_size * embed_dim
    conv_w = jax.random.normal(kw_, (embed_dim, C, patch_size, patch_size),
                               dtype=jnp.float32) * math.sqrt(2.0 / fan_out)
    # small non-trivial bias / affine so those code paths are actually exercised
    conv_b = 0.1 * jax.random.normal(kb, (embed_dim,), dtype=jnp.float32)
    ln_w = 1.0 + 0.1 * jax.random.normal(kg, (embed_dim,), dtype=jnp.float32)
    ln_b = 0.1 * jax.random.normal(kbt, (embed_dim,), dtype=jnp.float32)

    ref, Ho_ref, Wo_ref = _reference(x, conv_w, conv_b, ln_w, ln_b,
                                     stride=stride, pad=patch_size // 2)

    # f32 compute path, auto tile (single N tile at this size, grid = (B, 1))
    out32, Ho, Wo = overlap_patch_embed(x, conv_w, conv_b, ln_w, ln_b,
                                        patch_size=patch_size, stride=stride,
                                        compute_dtype=jnp.float32)
    out32 = jax.block_until_ready(out32)
    assert (Ho, Wo) == (Ho_ref, Wo_ref)
    assert out32.shape == (B, Ho * Wo, embed_dim)
    assert jnp.allclose(out32, ref, atol=2e-3, rtol=2e-3)

    # bf16 streaming path, 2 row-tiles per image (exercises the N grid axis),
    # padded-output mode (no post-hoc unpad pass).
    outbf_p, Ho2, Wo2 = overlap_patch_embed(x, conv_w, conv_b, ln_w, ln_b,
                                            patch_size=patch_size, stride=stride,
                                            compute_dtype=jnp.bfloat16, tile_n=8,
                                            return_padded=True)
    outbf_p = jax.block_until_ready(outbf_p)
    assert (Ho2, Wo2) == (Ho, Wo)
    assert outbf_p.shape[2] % 128 == 0 and outbf_p.shape[:2] == (B, Ho * Wo)
    assert outbf_p.dtype == x.dtype
    outbf = outbf_p[:, :, :embed_dim]
    assert jnp.allclose(outbf, ref, atol=3e-2, rtol=3e-2)
    # lane padding must be exactly zero
    assert jnp.all(outbf_p[:, :, embed_dim:] == 0)

    print("KERNEL_OK")
</pallas_src>

<mosaic_0001>
module attributes {stable_mosaic.version = 11 : i64} {
  func.func @_patch_embed_kernel(%arg0: i32, %arg1: i32, %arg2: memref<1x16x256xf32, #tpu.memory_space<vmem>>, %arg3: memref<256x128xf32, #tpu.memory_space<vmem>>, %arg4: memref<3x128xf32, #tpu.memory_space<vmem>>, %arg5: memref<1x16x128xf32, #tpu.memory_space<vmem>>) attributes {dimension_semantics = [#tpu.dimension_semantics<parallel>, #tpu.dimension_semantics<parallel>], iteration_bounds = array<i64: 2, 1>, scalar_prefetch = 0 : i64, scratch_operands = 0 : i64, tpu.core_type = #tpu.core_type<tc>, window_params = [{transform_indices = @transform_0, window_bounds = array<i64: 1, 16, 256>}, {pipeline_mode = #tpu.pipeline_mode<synchronous>, transform_indices = @transform_1, window_bounds = array<i64: 256, 128>}, {pipeline_mode = #tpu.pipeline_mode<synchronous>, transform_indices = @transform_2, window_bounds = array<i64: 3, 128>}, {transform_indices = @transform_3, window_bounds = array<i64: 1, 16, 128>}]} {
    %c0 = arith.constant 0 : index
    %c0_0 = arith.constant 0 : index
    %c0_1 = arith.constant 0 : index
    %0 = vector.load %arg2[%c0, %c0_0, %c0_1] : memref<1x16x256xf32, #tpu.memory_space<vmem>>, vector<1x16x256xf32>
    %1 = vector.shape_cast %0 : vector<1x16x256xf32> to vector<16x256xf32>
    %c0_2 = arith.constant 0 : index
    %c0_3 = arith.constant 0 : index
    %2 = vector.load %arg3[%c0_2, %c0_3] : memref<256x128xf32, #tpu.memory_space<vmem>>, vector<256x128xf32>
    %cst = arith.constant dense<0.000000e+00> : vector<16x128xf32>
    %3 = tpu.matmul %1, %2, %cst {dimension_numbers = #tpu.dot_dimension_numbers<[1], [0], [0], [1], [0, 0, 1, 1], [], []>} : vector<16x256xf32>, vector<256x128xf32>, vector<16x128xf32> -> vector<16x128xf32>
    %c0_4 = arith.constant 0 : index
    %c0_5 = arith.constant 0 : index
    %4 = vector.load %arg4[%c0_4, %c0_5] : memref<3x128xf32, #tpu.memory_space<vmem>>, vector<1x128xf32>
    %5 = vector.broadcast %4 : vector<1x128xf32> to vector<16x128xf32>
    %6 = arith.addf %3, %5 : vector<16x128xf32>
    %cst_6 = arith.constant dense<0.000000e+00> : vector<16xf32>
    %7 = vector.multi_reduction <add>, %6, %cst_6 [1] : vector<16x128xf32> to vector<16xf32>
    %8 = vector.shape_cast %7 : vector<16xf32> to vector<16x1xf32>
    %cst_7 = arith.constant 3.125000e-02 : f32
    %9 = vector.broadcast %cst_7 : f32 to vector<16x1xf32>
    %10 = arith.mulf %8, %9 : vector<16x1xf32>
    %11 = vector.broadcast %10 : vector<16x1xf32> to vector<16x128xf32>
    %12 = arith.subf %6, %11 : vector<16x128xf32>
    %13 = tpu.iota {dimensions = array<i32: 1>} : vector<16x128xi32>
    %c32_i32 = arith.constant 32 : i32
    %14 = vector.broadcast %c32_i32 : i32 to vector<16x128xi32>
    %15 = arith.cmpi slt, %13, %14 : vector<16x128xi32>
    %cst_8 = arith.constant 0.000000e+00 : f32
    %16 = vector.broadcast %cst_8 : f32 to vector<16x128xf32>
    %17 = arith.select %15, %12, %16 : vector<16x128xi1>, vector<16x128xf32>
    %18 = arith.mulf %17, %17 : vector<16x128xf32>
    %cst_9 = arith.constant dense<0.000000e+00> : vector<16xf32>
    %19 = vector.multi_reduction <add>, %18, %cst_9 [1] : vector<16x128xf32> to vector<16xf32>
    %20 = vector.shape_cast %19 : vector<16xf32> to vector<16x1xf32>
    %cst_10 = arith.constant 3.125000e-02 : f32
    %21 = vector.broadcast %cst_10 : f32 to vector<16x1xf32>
    %22 = arith.mulf %20, %21 : vector<16x1xf32>
    %cst_11 = arith.constant 9.99999974E-6 : f32
    %23 = vector.broadcast %cst_11 : f32 to vector<16x1xf32>
    %24 = arith.addf %22, %23 : vector<16x1xf32>
    %25 = math.rsqrt %24 : vector<16x1xf32>
    %26 = vector.broadcast %25 : vector<16x1xf32> to vector<16x128xf32>
    %27 = arith.mulf %17, %26 : vector<16x128xf32>
    %c1 = arith.constant 1 : index
    %c0_12 = arith.constant 0 : index
    %28 = vector.load %arg4[%c1, %c0_12] : memref<3x128xf32, #tpu.memory_space<vmem>>, vector<1x128xf32>
    %29 = vector.broadcast %28 : vector<1x128xf32> to vector<16x128xf32>
    %30 = arith.mulf %27, %29 : vector<16x128xf32>
    %c2 = arith.constant 2 : index
    %c0_13 = arith.constant 0 : index
    %31 = vector.load %arg4[%c2, %c0_13] : memref<3x128xf32, #tpu.memory_space<vmem>>, vector<1x128xf32>
    %32 = vector.broadcast %31 : vector<1x128xf32> to vector<16x128xf32>
    %33 = arith.addf %30, %32 : vector<16x128xf32>
    %c0_14 = arith.constant 0 : index
    %c0_15 = arith.constant 0 : index
    %c0_16 = arith.constant 0 : index
    %34 = vector.load %arg5[%c0_14, %c0_15, %c0_16] : memref<1x16x128xf32, #tpu.memory_space<vmem>>, vector<1x16x128xf32>
    %35 = vector.shape_cast %34 : vector<1x16x128xf32> to vector<16x128xf32>
    %36 = vector.shape_cast %33 : vector<16x128xf32> to vector<1x16x128xf32>
    tpu.vector_store %arg5[%c0_14, %c0_15, %c0_16], %36 {strides = array<i32>} : memref<1x16x128xf32, #tpu.memory_space<vmem>>, vector<1x16x128xf32>,
    return
  }
  func.func @transform_0(%arg0: i32, %arg1: i32) -> (i32, i32, i32) {
    %c0_i32 = arith.constant 0 : i32
    %c0_i32_0 = arith.constant 0 : i32
    return %arg0, %arg1, %c0_i32 : i32, i32, i32
  }
  func.func @transform_1(%arg0: i32, %arg1: i32) -> (i32, i32) {
    %c0_i32 = arith.constant 0 : i32
    %c0_i32_0 = arith.constant 0 : i32
    %c0_i32_1 = arith.constant 0 : i32
    return %c0_i32, %c0_i32_0 : i32, i32
  }
  func.func @transform_2(%arg0: i32, %arg1: i32) -> (i32, i32) {
    %c0_i32 = arith.constant 0 : i32
    %c0_i32_0 = arith.constant 0 : i32
    %c0_i32_1 = arith.constant 0 : i32
    return %c0_i32, %c0_i32_0 : i32, i32
  }
  func.func @transform_3(%arg0: i32, %arg1: i32) -> (i32, i32, i32) {
    %c0_i32 = arith.constant 0 : i32
    %c0_i32_0 = arith.constant 0 : i32
    return %arg0, %arg1, %c0_i32 : i32, i32, i32
  }
}

</mosaic_0001>

<llo_original>
// kernel: tpu_custom_call.1
$region0: #{tpu_custom_call.1}
  #allocation0 [shape = 'u32[]', space=smem, size = 0x4, offset = 0x4, fixed_abs, tag = 'smem constant byte address 0x4 - core index']
  #allocation1 [shape = 'u32[144,128]{1,0:T(1,128)}', space=vmem, size = 0x12000, scoped, tag = 'internal scratch']
  %s0 = inlined_call_operand.hbm [shape: f32[2,16,256], index: 0, kind: input, shape index: {}]
  %s1 = inlined_call_operand.hbm [shape: f32[256,128], index: 1, kind: input, shape index: {}]
  %s2 = inlined_call_operand.hbm [shape: f32[3,128], index: 2, kind: input, shape index: {}]
  %s3 = inlined_call_operand.hbm [shape: f32[2,16,128], index: 3, kind: output, shape index: {}]
  %s4 = sld [smem:[#allocation0]]
  $region57: #{tpu_custom_call.1} parent=0
    _
  %s6 = ssub.s32 1, %s4
  %s7 = scalar_select 0, %s6, %s4
  $region1: #{tpu_custom_call.1} parent=0
    #allocation2 [shape = 'u8[32768]{0}', space=vmem, size = 0x8000, scoped, tag = 'input window, operand 0']
    #allocation3 [shape = 's32[2]{0}', space=sflag, size = 0x8, scoped, tag = 'scoped memory for tpu_custom_call.1']
    #allocation4 [shape = 's32[2]{0}', space=sflag, size = 0x8, scoped, tag = 'scoped memory for tpu_custom_call.1']
    #allocation5 [shape = 'u8[131072]{0}', space=vmem, size = 0x20000, scoped, tag = 'input window, operand 1, single buffered']
    #allocation6 [shape = 's32[1]{0}', space=sflag, size = 0x4, scoped, tag = 'scoped memory for tpu_custom_call.1']
    #allocation7 [shape = 'u8[2048]{0}', space=vmem, size = 0x800, scoped, tag = 'input window, operand 2, single buffered']
    #allocation8 [shape = 'u8[16384]{0}', space=vmem, size = 0x4000, scoped, tag = 'output window, operand 0']
    %8 = vsyncpa [#allocation3], 0
    %s9 = scalar_lea.sflag [#allocation3], 1
    %10 = vsyncpa %s9, 0
    %11 = vsyncpa [#allocation6], 0
    %12 = vsyncpa [#allocation4], 0
    %s13 = scalar_lea.sflag [#allocation4], 1
    %14 = vsyncpa %s13, 0
    loop: start=0, step=1, limit=4
    $region2: #{tpu_custom_call.1} parent=1 // loop_pre_header
      _
    $region3: #{tpu_custom_call.1} parent=1 // loop_header
      %s16 = sphi 0, %s20
      %p17 = scmp.ge.s32.totalorder %s16, 4
      %s23 = sphi 0, %s35
      %s24 = sphi 0, %s31
      %s25 = sphi 0, %s23
      %s26 = sphi 0, %s24
      %s27 = sphi 0, %s25
      %s28 = sphi 0, %s26
      %s40 = sphi 0, %s42
      %s43 = sphi 0, %s40
      %s44 = sphi 0, %s43
      %s60 = sphi 0, %s44
      %s64 = sphi 0, %s64
      %s66 = sphi 0, %s64
      %s67 = sphi 0, %s66
      %s81 = sphi 0, %s67
      %s85 = sphi 0, %s85
      %s87 = sphi 0, %s85
      %s88 = sphi 0, %s87
      %s102 = sphi 0, %s88
      %s110 = sphi 0, %s112
      %s113 = sphi 0, %s110
      %s114 = sphi 0, %s113
      %s130 = sphi 0, %s114
    $region4: #{tpu_custom_call.1} parent=1 // loop_header_branch
      %19 = sbr.rel (%p17) target = $region8
    $region5: #{tpu_custom_call.1} parent=1 // loop_body
      %s21 = ssub.s32 %s16, 1
      %s22 = ssub.s32 %s16, 2
      %s29 = sadd.s32 1, %s24
      %p30 = scmp.ge.s32.totalorder %s29, 1
      %s31 = scalar_select %p30, 0, %s29
      %s32 = sadd.s32 1, %s23
      %s33 = scalar_select %p30, %s32, %s23
      %p34 = scmp.ge.s32.totalorder %s33, 2
      %s35 = scalar_select %p34, 0, %s33
      %s36 = ssub.s32 %s23, %s35
      %s37 = ssub.s32 %s24, %s31
      %s38 = sor.u32 %s36, %s37
      %p39 = scmp.eq.s32.totalorder %s38, 0
      %s41 = sadd.s32 %s40, 1
      %s42 = scalar_select %p39, %s40, %s41
      %p45 = pneg %p39
      %p46 = scmp.eq.s32.totalorder %s16, 1
      %p47 = por %p45, %p46
      %p48 = scmp.ne.s32.totalorder %s40, %s43
      %p49 = scmp.eq.s32.totalorder %s16, 0
      %p50 = por %p48, %p49
      %p51 = scmp.ne.s32.totalorder %s40, %s43
      %p52 = scmp.eq.s32.totalorder %s21, 1
      %p53 = por %p51, %p52
      %p54 = scmp.ne.s32.totalorder %s43, %s44
      %p55 = scmp.eq.s32.totalorder %s21, 0
      %p56 = por %p54, %p55
      %p57 = scmp.ne.s32.totalorder %s43, %s44
      %p58 = scmp.eq.s32.totalorder %s22, 1
      %p59 = por %p57, %p58
      %p61 = scmp.ne.s32.totalorder %s44, %s60
      %p62 = scmp.eq.s32.totalorder %s22, 0
      %p63 = por %p61, %p62
      %s65 = sadd.s32 %s64, 1
      %p68 = scmp.eq.s32.totalorder %s16, 1
      %p69 = scmp.ne.s32.totalorder %s64, %s66
      %p70 = scmp.eq.s32.totalorder %s16, 0
      %p71 = por %p69, %p70
      %p72 = scmp.ne.s32.totalorder %s64, %s66
      %p73 = scmp.eq.s32.totalorder %s21, 1
      %p74 = por %p72, %p73
      %p75 = scmp.ne.s32.totalorder %s66, %s67
      %p76 = scmp.eq.s32.totalorder %s21, 0
      %p77 = por %p75, %p76
      %p78 = scmp.ne.s32.totalorder %s66, %s67
      %p79 = scmp.eq.s32.totalorder %s22, 1
      %p80 = por %p78, %p79
      %p82 = scmp.ne.s32.totalorder %s67, %s81
      %p83 = scmp.eq.s32.totalorder %s22, 0
      %p84 = por %p82, %p83
      %s86 = sadd.s32 %s85, 1
      %p89 = scmp.eq.s32.totalorder %s16, 1
      %p90 = scmp.ne.s32.totalorder %s85, %s87
      %p91 = scmp.eq.s32.totalorder %s16, 0
      %p92 = por %p90, %p91
      %p93 = scmp.ne.s32.totalorder %s85, %s87
      %p94 = scmp.eq.s32.totalorder %s21, 1
      %p95 = por %p93, %p94
      %p96 = scmp.ne.s32.totalorder %s87, %s88
      %p97 = scmp.eq.s32.totalorder %s21, 0
      %p98 = por %p96, %p97
      %p99 = scmp.ne.s32.totalorder %s87, %s88
      %p100 = scmp.eq.s32.totalorder %s22, 1
      %p101 = por %p99, %p100
      %p103 = scmp.ne.s32.totalorder %s88, %s102
      %p104 = scmp.eq.s32.totalorder %s22, 0
      %p105 = por %p103, %p104
      %s106 = ssub.s32 %s23, %s35
      %s107 = ssub.s32 %s24, %s31
      %s108 = sor.u32 %s106, %s107
      %p109 = scmp.eq.s32.totalorder %s108, 0
      %s111 = sadd.s32 %s110, 1
      %s112 = scalar_select %p109, %s110, %s111
      %p115 = pneg %p109
      %p116 = scmp.eq.s32.totalorder %s16, 1
      %p117 = por %p115, %p116
      %p118 = scmp.ne.s32.totalorder %s110, %s113
      %p119 = scmp.eq.s32.totalorder %s16, 0
      %p120 = por %p118, %p119
      %p121 = scmp.ne.s32.totalorder %s110, %s113
      %p122 = scmp.eq.s32.totalorder %s21, 1
      %p123 = por %p121, %p122
      %p124 = scmp.ne.s32.totalorder %s113, %s114
      %p125 = scmp.eq.s32.totalorder %s21, 0
      %p126 = por %p124, %p125
      %p127 = scmp.ne.s32.totalorder %s113, %s114
      %p128 = scmp.eq.s32.totalorder %s22, 1
      %p129 = por %p127, %p128
      %p131 = scmp.ne.s32.totalorder %s114, %s130
      %p132 = scmp.eq.s32.totalorder %s22, 0
      %p133 = por %p131, %p132
      %p134 = scmp.le.s32.totalorder 1, %s16
      %p135 = scmp.lt.s32.totalorder %s16, 3
      %p136 = pnand %p134, %p135
      %p137 = pneg %p136
      // Predicated region
      $region9: #{tpu_custom_call.1} parent=5 // pred_check
        _
      $region10: #{tpu_custom_call.1} parent=5 // pred_check_branch
        %139 = sbr.rel (%p136) target = $region12
      $region11: #{tpu_custom_call.1} parent=5 // pred_region
        %s140 = ssub.s32 %s16, 1
        // Predicated region
        $region13: #{tpu_custom_call.1} parent=11 // pred_check
          %p141 = pneg %p77
        $region14: #{tpu_custom_call.1} parent=11 // pred_check_branch
          %143 = sbr.rel (%p141) target = $region16
        $region15: #{tpu_custom_call.1} parent=11 // pred_region
          %s145 = ssub.s32 4096, 4096
          %146 = vsyncadd [#allocation6], %s145
          %s147 = sshll.u32 [#allocation5], 4
          %s148 = int_to_ptr.vmem [resolvable:$true] %s147
          %153 = dma.hbm_to_vmem [thread:$0]  %s1, 4096, %s148, [#allocation6], 128, 128, 8
        $region16: #{tpu_custom_call.1} parent=11 // pred_fallthru
          _
        // Predicated region
        $region17: #{tpu_custom_call.1} parent=11 // pred_check
          %p154 = pneg %p98
        $region18: #{tpu_custom_call.1} parent=11 // pred_check_branch
          %156 = sbr.rel (%p154) target = $region20
        $region19: #{tpu_custom_call.1} parent=11 // pred_region
          %s158 = ssub.s32 64, 64
          %159 = vsyncadd [#allocation6], %s158
          %s161 = sshll.u32 [#allocation7], 4
          %s162 = int_to_ptr.vmem [resolvable:$true] %s161
          %164 = dma.hbm_to_vmem [thread:$0]  %s2, 64, %s162, [#allocation6]
        $region20: #{tpu_custom_call.1} parent=11 // pred_fallthru
          _
      $region12: #{tpu_custom_call.1} parent=5 // pred_fallthru
        _
      %p165 = scmp.lt.s32.totalorder %s16, 2
      // Predicated region
      $region21: #{tpu_custom_call.1} parent=5 // pred_check
        %p166 = pneg %p165
      $region22: #{tpu_custom_call.1} parent=5 // pred_check_branch
        %168 = sbr.rel (%p166) target = $region24
      $region23: #{tpu_custom_call.1} parent=5 // pred_region
        // Predicated region
        $region25: #{tpu_custom_call.1} parent=23 // pred_check
          %p169 = pneg %p50
        $region26: #{tpu_custom_call.1} parent=23 // pred_check_branch
          %171 = sbr.rel (%p169) target = $region28
        $region27: #{tpu_custom_call.1} parent=23 // pred_region
          %s172 = sand.u32 %s40, 1
          %s173 = scalar_lea.sflag [#allocation3], %s172
          %s174 = sand.u32 %s40, 1
          %s175 = smul.addr %s174, 32
          %s176 = scalar_lea.vmem [#allocation2], %s175
          %s177 = smul.u32 2, %s24
          %s179 = ssub.s32 512, 512
          %180 = vsyncadd %s173, %s179
          %s181 = smul.addr %s177, 2
          %s182 = smul.addr %s23, 4
          %s183 = sadd.s32 %s181, %s182
          %s184 = smul.addr %s183, 128
          %s185 = scalar_lea.hbm %s0, %s184
          %s186 = sshll.u32 %s176, 4
          %s187 = int_to_ptr.vmem [resolvable:$true] %s186
          %192 = dma.hbm_to_vmem [thread:$0]  %s185, 512, %s187, %s173, 256, 256, 16
        $region28: #{tpu_custom_call.1} parent=23 // pred_fallthru
          _
      $region24: #{tpu_custom_call.1} parent=5 // pred_fallthru
        _
      %p193 = scmp.le.s32.totalorder 1, %s16
      %p194 = scmp.lt.s32.totalorder %s16, 3
      %p195 = pnand %p193, %p194
      %p196 = pneg %p195
      // Predicated region
      $region29: #{tpu_custom_call.1} parent=5 // pred_check
        _
      $region30: #{tpu_custom_call.1} parent=5 // pred_check_branch
        %198 = sbr.rel (%p195) target = $region32
      $region31: #{tpu_custom_call.1} parent=5 // pred_region
        %s199 = ssub.s32 %s16, 1
        %s200 = sand.u32 %s43, 1
        %s201 = scalar_lea.sflag [#allocation3], %s200
        %s202 = sand.u32 %s43, 1
        %s203 = smul.addr %s202, 32
        %s204 = scalar_lea.vmem [#allocation2], %s203
        // Predicated region
        $region33: #{tpu_custom_call.1} parent=31 // pred_check
          %p205 = pneg %p56
        $region34: #{tpu_custom_call.1} parent=31 // pred_check_branch
          %207 = sbr.rel (%p205) target = $region36
        $region35: #{tpu_custom_call.1} parent=31 // pred_region
          %208 = dma.done %s201, 512
        $region36: #{tpu_custom_call.1} parent=31 // pred_fallthru
          _
        // Predicated region
        $region37: #{tpu_custom_call.1} parent=31 // pred_check
          %p209 = pneg %p77
        $region38: #{tpu_custom_call.1} parent=31 // pred_check_branch
          %211 = sbr.rel (%p209) target = $region40
        $region39: #{tpu_custom_call.1} parent=31 // pred_region
          %212 = dma.done [#allocation6], 4096
        $region40: #{tpu_custom_call.1} parent=31 // pred_fallthru
          _
        // Predicated region
        $region41: #{tpu_custom_call.1} parent=31 // pred_check
          %p213 = pneg %p98
        $region42: #{tpu_custom_call.1} parent=31 // pred_check_branch
          %215 = sbr.rel (%p213) target = $region44
        $region43: #{tpu_custom_call.1} parent=31 // pred_region
          %216 = dma.done [#allocation6], 64
        $region44: #{tpu_custom_call.1} parent=31 // pred_fallthru
          _
        %s217 = sand.u32 %s43, 1
        %s218 = scalar_lea.sflag [#allocation3], %s217
        %s219 = sand.u32 %s43, 1
        %s220 = smul.addr %s219, 32
        %s221 = scalar_lea.vmem [#allocation2], %s220
        %p222 = pneg %p56
        %p223 = pneg %p53
        %p224 = pneg %p77
        %p225 = pneg %p74
        %p226 = pneg %p98
        %p227 = pneg %p95
        %p228 = pneg %p126
        %p229 = pneg %p123
        %s230 = sand.u32 %s113, 1
        %s231 = scalar_lea.sflag [#allocation4], %s230
        %s232 = sand.u32 %s113, 1
        %s233 = smul.addr %s232, 16
        %s234 = scalar_lea.vmem [#allocation8], %s233
        %s235 = smul.u32 2, %s26
        %s236 = smul.u32 2, %s26
        %v237 = vld [vmem:[%s204] sm:$0xff]
        %v238 = vld [vmem:[%s204 + $0x8] sm:$0xff]
        %v239 = vld [vmem:[%s204 + $0x10] sm:$0xff]
        %v240 = vld [vmem:[%s204 + $0x18] sm:$0xff]
        %v241 = vld [vmem:[#allocation5] sm:$0xff]
        %v242 = vld [vmem:[#allocation5 + $0x8] sm:$0xff]
        %v243 = vld [vmem:[#allocation5 + $0x10] sm:$0xff]
        %v244 = vld [vmem:[#allocation5 + $0x18] sm:$0xff]
        %v245 = vld [vmem:[#allocation5 + $0x20] sm:$0xff]
        %v246 = vld [vmem:[#allocation5 + $0x28] sm:$0xff]
        %v247 = vld [vmem:[#allocation5 + $0x30] sm:$0xff]
        %v248 = vld [vmem:[#allocation5 + $0x38] sm:$0xff]
        %v249 = vld [vmem:[#allocation5 + $0x40] sm:$0xff]
        %v250 = vld [vmem:[#allocation5 + $0x48] sm:$0xff]
        %v251 = vld [vmem:[#allocation5 + $0x50] sm:$0xff]
        %v252 = vld [vmem:[#allocation5 + $0x58] sm:$0xff]
        %v253 = vld [vmem:[#allocation5 + $0x60] sm:$0xff]
        %v254 = vld [vmem:[#allocation5 + $0x68] sm:$0xff]
        %v255 = vld [vmem:[#allocation5 + $0x70] sm:$0xff]
        %v256 = vld [vmem:[#allocation5 + $0x78] sm:$0xff]
        %v257 = vld [vmem:[#allocation5 + $0x80] sm:$0xff]
        %v258 = vld [vmem:[#allocation5 + $0x88] sm:$0xff]
        %v259 = vld [vmem:[#allocation5 + $0x90] sm:$0xff]
        %v260 = vld [vmem:[#allocation5 + $0x98] sm:$0xff]
        %v261 = vld [vmem:[#allocation5 + $0xa0] sm:$0xff]
        %v262 = vld [vmem:[#allocation5 + $0xa8] sm:$0xff]
        %v263 = vld [vmem:[#allocation5 + $0xb0] sm:$0xff]
        %v264 = vld [vmem:[#allocation5 + $0xb8] sm:$0xff]
        %v265 = vld [vmem:[#allocation5 + $0xc0] sm:$0xff]
        %v266 = vld [vmem:[#allocation5 + $0xc8] sm:$0xff]
        %v267 = vld [vmem:[#allocation5 + $0xd0] sm:$0xff]
        %v268 = vld [vmem:[#allocation5 + $0xd8] sm:$0xff]
        %v269 = vld [vmem:[#allocation5 + $0xe0] sm:$0xff]
        %v270 = vld [vmem:[#allocation5 + $0xe8] sm:$0xff]
        %v271 = vld [vmem:[#allocation5 + $0xf0] sm:$0xff]
        %v272 = vld [vmem:[#allocation5 + $0xf8] sm:$0xff]
        %v273 = vld [vmem:[#allocation7] sm:$0x1]
        %v274 = vlaneseq
        %v275 = vshrl.u32 %v274, 7
        %v276 = vsub.s32 0, %v275
        %v277 = vrot.slane %v273, %v276
        %278 = vmatprep.subr.mxu0 0.0
        %279 = vmatpush1.msra.mxu0 %v256
        %280 = vmatprep.subr.mxu0 0.0
        %281 = vmatpush1.msra.mxu0 %v255
        %282 = vmatprep.subr.mxu0 0.0
        %283 = vmatpush1.msra.mxu0 %v254
        %284 = vmatprep.subr.mxu0 0.0
        %285 = vmatpush1.msra.mxu0 %v253
        %286 = vmatprep.subr.mxu0 0.0
        %287 = vmatpush1.msra.mxu0 %v252
        %288 = vmatprep.subr.mxu0 0.0
        %289 = vmatpush1.msra.mxu0 %v251
        %290 = vmatprep.subr.mxu0 0.0
        %291 = vmatpush1.msra.mxu0 %v250
        %292 = vmatprep.subr.mxu0 0.0
        %293 = vmatpush1.msra.mxu0 %v249
        %294 = vmatprep.subr.mxu0 0.0
        %295 = vmatpush1.msra.mxu0 %v248
        %296 = vmatprep.subr.mxu0 0.0
        %297 = vmatpush1.msra.mxu0 %v247
        %298 = vmatprep.subr.mxu0 0.0
        %299 = vmatpush1.msra.mxu0 %v246
        %300 = vmatprep.subr.mxu0 0.0
        %301 = vmatpush1.msra.mxu0 %v245
        %302 = vmatprep.subr.mxu0 0.0
        %303 = vmatpush1.msra.mxu0 %v244
        %304 = vmatprep.subr.mxu0 0.0
        %305 = vmatpush1.msra.mxu0 %v243
        %306 = vmatprep.subr.mxu0 0.0
        %307 = vmatpush1.msra.mxu0 %v242
        %308 = vmatprep.subr.mxu0 0.0
        %309 = vmatpush1.msra.mxu0 %v241
        %310 = vmatprep.subr.mxu0 0.0
        %311 = vmatpush2.msra.mxu0 %v272
        %312 = vmatprep.subr.mxu0 0.0
        %313 = vmatpush2.msra.mxu0 %v271
        %314 = vmatprep.subr.mxu0 0.0
        %315 = vmatpush2.msra.mxu0 %v270
        %316 = vmatprep.subr.mxu0 0.0
        %317 = vmatpush2.msra.mxu0 %v269
        %318 = vmatprep.subr.mxu0 0.0
        %319 = vmatpush2.msra.mxu0 %v268
        %320 = vmatprep.subr.mxu0 0.0
        %321 = vmatpush2.msra.mxu0 %v267
        %322 = vmatprep.subr.mxu0 0.0
        %323 = vmatpush2.msra.mxu0 %v266
        %324 = vmatprep.subr.mxu0 0.0
        %325 = vmatpush2.msra.mxu0 %v265
        %326 = vmatprep.subr.mxu0 0.0
        %327 = vmatpush2.msra.mxu0 %v264
        %328 = vmatprep.subr.mxu0 0.0
        %329 = vmatpush2.msra.mxu0 %v263
        %330 = vmatprep.subr.mxu0 0.0
        %331 = vmatpush2.msra.mxu0 %v262
        %332 = vmatprep.subr.mxu0 0.0
        %333 = vmatpush2.msra.mxu0 %v261
        %334 = vmatprep.subr.mxu0 0.0
        %335 = vmatpush2.msra.mxu0 %v260
        %336 = vmatprep.subr.mxu0 0.0
        %337 = vmatpush2.msra.mxu0 %v259
        %338 = vmatprep.subr.mxu0 0.0
        %339 = vmatpush2.msra.mxu0 %v258
        %340 = vmatprep.subr.mxu0 0.0
        %341 = vmatpush2.msra.mxu0 %v257
        %342 = vmatprep.mubr.f32.mxu0 %v238
        %343 = vmatmul.mubr.f32.gmra.mxu0 %v237
        %v344 = vpop.f32.mrf.mxu0
        %v345 = vadd.f32 %v277, %v344
        %v346 = vpop.f32.mrf.mxu0
        %347 = vmatprep.mubr.f32.mxu0 %v240
        %348 = vmatmul.mubr.f32.gmra.mxu0 %v239
        %v349 = vpop.f32.mrf.mxu0
        %v350 = vadd.f32 %v277, %v349
        %v351 = vpop.f32.mrf.mxu0
        %352 = vdwg.mxu0
        %353 = vadd.xlane.f32.xlu0 %v345
        %v354 = vpop.xlane.xlu0 %353
        %355 = vadd.xlane.f32.xlu0 %v350
        %v356 = vpop.xlane.xlu0 %355
        %v357 = vmul.f32 %v354, 0.03125
        %v358 = vmul.f32 %v356, 0.03125
        %v359 = vsub.f32 %v345, %v357
        %v360 = vsub.f32 %v350, %v358
        %v361 = vlaneseq
        %v362 = vand.u32 %v361, 127
        %vm363 = vcmp.lt.s32.totalorder %v362, 32
        %v364 = vsel %vm363, %v359, 0.0
        %v365 = vsel %vm363, %v360, 0.0
        %v366 = vmul.f32 %v364, %v364
        %v367 = vmul.f32 %v365, %v365
        %368 = vadd.xlane.f32.xlu0 %v366
        %v369 = vpop.xlane.xlu0 %368
        %370 = vadd.xlane.f32.xlu0 %v367
        %v371 = vpop.xlane.xlu0 %370
        %v372 = vmul.f32 %v369, 0.03125
        %v373 = vmul.f32 %v371, 0.03125
        %v374 = vadd.f32 %v372, 1e-05
        %v375 = vadd.f32 %v373, 1e-05
        %v376 = vrsqrt.pop %v374
        %v377 = vrsqrt.pop %v375
        %v378 = vmul.f32 %v364, %v376
        %v379 = vmul.f32 %v365, %v377
        %v380 = vld [vmem:[#allocation7 + $0x1] sm:$0x1]
        %v381 = vlaneseq
        %v382 = vshrl.u32 %v381, 7
        %v383 = vsub.s32 0, %v382
        %v384 = vrot.slane %v380, %v383
        %v385 = vmul.f32 %v378, %v384
        %v386 = vmul.f32 %v379, %v384
        %v387 = vld [vmem:[#allocation7 + $0x2] sm:$0x1]
        %v388 = vlaneseq
        %v389 = vshrl.u32 %v388, 7
        %v390 = vsub.s32 0, %v389
        %v391 = vrot.slane %v387, %v390
        %v392 = vadd.f32 %v385, %v391
        %v393 = vadd.f32 %v386, %v391
        %394 = vst [vmem:[%s234] sm:$0xff] %v392
        %395 = vst [vmem:[%s234 + $0x8] sm:$0xff] %v393
        %s396 = sand.u32 %s113, 1
        %s397 = scalar_lea.sflag [#allocation4], %s396
        %s398 = sand.u32 %s113, 1
        %s399 = smul.addr %s398, 16
        %s400 = scalar_lea.vmem [#allocation8], %s399
        // Predicated region
        $region45: #{tpu_custom_call.1} parent=31 // pred_check
          %p401 = pneg %p123
        $region46: #{tpu_custom_call.1} parent=31 // pred_check_branch
          %403 = sbr.rel (%p401) target = $region48
        $region47: #{tpu_custom_call.1} parent=31 // pred_region
          %s404 = smul.u32 2, %s26
          %s406 = ssub.s32 256, 256
          %407 = vsyncadd %s397, %s406
          %s408 = smul.addr %s25, 2
          %s409 = sadd.s32 %s404, %s408
          %s410 = smul.addr %s409, 128
          %s411 = scalar_lea.hbm %s3, %s410
          %s412 = sshll.u32 %s400, 4
          %s413 = int_to_ptr.vmem [resolvable:$true] %s412
          %418 = dma.vmem_to_hbm [thread:$0]  %s413, 256, %s411, %s397, 128, 128, 8
        $region48: #{tpu_custom_call.1} parent=31 // pred_fallthru
          _
      $region32: #{tpu_custom_call.1} parent=5 // pred_fallthru
        _
      %p419 = scmp.le.s32.totalorder 2, %s16
      // Predicated region
      $region49: #{tpu_custom_call.1} parent=5 // pred_check
        %p420 = pneg %p419
      $region50: #{tpu_custom_call.1} parent=5 // pred_check_branch
        %422 = sbr.rel (%p420) target = $region52
      $region51: #{tpu_custom_call.1} parent=5 // pred_region
        %s423 = ssub.s32 %s16, 2
        // Predicated region
        $region53: #{tpu_custom_call.1} parent=51 // pred_check
          %p424 = pneg %p129
        $region54: #{tpu_custom_call.1} parent=51 // pred_check_branch
          %426 = sbr.rel (%p424) target = $region56
        $region55: #{tpu_custom_call.1} parent=51 // pred_region
          %s427 = sand.u32 %s114, 1
          %s428 = scalar_lea.sflag [#allocation4], %s427
          %s429 = sand.u32 %s114, 1
          %s430 = smul.addr %s429, 16
          %s431 = scalar_lea.vmem [#allocation8], %s430
          %432 = dma.done %s428, 256
        $region56: #{tpu_custom_call.1} parent=51 // pred_fallthru
          _
      $region52: #{tpu_custom_call.1} parent=5 // pred_fallthru
        _
    $region6: #{tpu_custom_call.1} parent=1 // loop_footer
      %s20 = sadd.s32 1, %s16
    $region7: #{tpu_custom_call.1} parent=1 // loop_footer_branch
      %15 = sbr.rel target = $region3
    $region8: #{tpu_custom_call.1} parent=1 // loop_exit
      _
    %433 = vsyncpa [#allocation3], 1
    %s434 = scalar_lea.sflag [#allocation3], 1
    %435 = vsyncpa %s434, 1
    %436 = vsyncpa [#allocation6], 1
    %437 = vsyncpa [#allocation4], 1
    %s438 = scalar_lea.sflag [#allocation4], 1
    %439 = vsyncpa %s438, 1

</llo_original>
